<compile_context>
chip_gen: v6e
topology: v6e:2x2x1
jax: 0.10.0
libtpu: 0.0.40
codegen_flags: <defaults>
</compile_context>

<pallas_src>
import functools

import jax
import jax.numpy as jnp
from jax.experimental import pallas as pl
from jax.experimental.pallas import tpu as pltpu

EPS = 1e-5


# --------------------------------------------------------------------------
# Hardware-aware sizing
# --------------------------------------------------------------------------
def _vmem_budget():
    """(vmem_limit_bytes, target_block_bytes) derived from the chip."""
    cap = 64 << 20  # safe default: v7x physical VMEM
    try:
        cap = int(pltpu.get_tpu_info().vmem_capacity_bytes)
    except Exception:
        pass
    vmem_limit = min(cap * 3 // 4, 96 << 20)   # 96 MiB on v5e/v6e, 48 MiB on v7x
    # One (N, ct, S) block appears ~4x as pipeline buffers (in+out, double
    # buffered) plus ~3 f32 block-sized temps in-kernel; /10 leaves headroom.
    target_block_bytes = max(vmem_limit // 10, 1 << 20)
    return vmem_limit, target_block_bytes


def _choose_ct(n, c, s, itemsize, target_bytes):
    """Largest legal channel tile (multiple of 8 or == C) whose (N, ct, S)
    block fits the target.  None -> no legal tile fits (use fallback)."""
    cands = [c] + [d for d in range(8, c, 8) if c % d == 0]
    fitting = [d for d in cands if n * d * s * itemsize <= target_bytes]
    return max(fitting) if fitting else None


# --------------------------------------------------------------------------
# Fused single-pass kernel: stats + permutation mix + apply in one grid step
# --------------------------------------------------------------------------
def _fused_kernel(x_ref, mix_ref, o_ref, *, eps, inv_denom):
    # x_ref/o_ref : VMEM (N, ct, S)      mix_ref : VMEM (N, N) f32 (resident)
    x = x_ref[...].astype(jnp.float32)
    n = x.shape[0]

    mean = jnp.mean(x, axis=-1, keepdims=True)                      # (N, ct, 1)
    centered = x - mean
    var = jnp.sum(centered * centered, axis=-1, keepdims=True) * inv_denom

    # mean_mix[i] = sum_j M[i, j] * mean[j]   (M = alpha*I + (1-alpha)*P[idx])
    # N is small and static -> unrolled O(N) outer-product accumulation.
    mix = mix_ref[...]                                              # (N, N)
    mean_mix = jnp.zeros_like(mean)
    var_mix = jnp.zeros_like(var)
    for j in range(n):
        col = mix[:, j:j + 1].reshape(n, 1, 1)                      # (N, 1, 1)
        mean_mix = mean_mix + col * mean[j:j + 1]
        var_mix = var_mix + col * var[j:j + 1]

    # out = (x - mean)/sqrt(var+eps) * sqrt(var_mix+eps) + mean_mix
    scale = jnp.sqrt((var_mix + eps) / (var + eps))                 # (N, ct, 1)
    o_ref[...] = (centered * scale + mean_mix).astype(o_ref.dtype)


def _fused_call(x3, mix, ct, eps, vmem_limit):
    N, C, S = x3.shape
    inv_denom = 1.0 / max(S - 1, 1)   # unbiased variance; guard S == 1
    kernel = functools.partial(_fused_kernel, eps=float(eps),
                               inv_denom=float(inv_denom))
    itemsize = jnp.dtype(x3.dtype).itemsize
    # NOTE(v7x): "parallel" lets the runtime shard the channel loop across
    # TensorCores where supported; CORE_PARALLEL could be forced if profiling
    # shows a single-TC loop on v7x.
    return pl.pallas_call(
        kernel,
        out_shape=jax.ShapeDtypeStruct((N, C, S), x3.dtype),
        grid=(C // ct,),
        in_specs=[
            pl.BlockSpec((N, ct, S), lambda c: (0, c, 0)),
            pl.BlockSpec((N, N), lambda c: (0, 0)),   # resident mixing matrix
        ],
        out_specs=pl.BlockSpec((N, ct, S), lambda c: (0, c, 0)),
        compiler_params=pltpu.CompilerParams(
            dimension_semantics=("parallel",),
            vmem_limit_bytes=vmem_limit,
        ),
        cost_estimate=pl.CostEstimate(
            flops=6 * N * C * S,
            transcendentals=0,
            bytes_accessed=2 * N * C * S * itemsize,
        ),
    )(x3, mix)


# --------------------------------------------------------------------------
# Fallback two-pass path (only when even the smallest fused block is too big)
# --------------------------------------------------------------------------
def _stats_kernel(x_ref, sum_ref, sumsq_ref):
    x = x_ref[...].astype(jnp.float32)
    sum_ref[...] = jnp.sum(x, axis=-1, keepdims=True)
    sumsq_ref[...] = jnp.sum(x * x, axis=-1, keepdims=True)


def _apply_kernel(x_ref, scale_ref, offset_ref, o_ref):
    x = x_ref[...].astype(jnp.float32)
    o_ref[...] = (x * scale_ref[...] + offset_ref[...]).astype(o_ref.dtype)


def _choose_tm(rows, s, itemsize, target_bytes):
    cands = [d for d in range(8, rows + 1, 8) if rows % d == 0]
    if not cands:
        return rows
    fitting = [d for d in cands if d * s * itemsize <= target_bytes]
    return max(fitting) if fitting else min(cands)


def _two_pass(x2, mix, eps, vmem_limit, target_bytes):
    # TODO(synk): add an accumulating S-tiled grid axis for the (rare) case
    # where even an 8-row block exceeds the VMEM budget.
    rows, S = x2.shape
    N = mix.shape[0]
    C = rows // N
    tm = _choose_tm(rows, S, jnp.dtype(x2.dtype).itemsize, target_bytes)
    grid = (rows // tm,)
    cparams = pltpu.CompilerParams(dimension_semantics=("parallel",),
                                   vmem_limit_bytes=vmem_limit)

    sum_x, sumsq_x = pl.pallas_call(
        _stats_kernel,
        out_shape=(jax.ShapeDtypeStruct((rows, 1), jnp.float32),
                   jax.ShapeDtypeStruct((rows, 1), jnp.float32)),
        grid=grid,
        in_specs=[pl.BlockSpec((tm, S), lambda i: (i, 0))],
        out_specs=[pl.BlockSpec((tm, 1), lambda i: (i, 0)),
                   pl.BlockSpec((tm, 1), lambda i: (i, 0))],
        compiler_params=cparams,
    )(x2)

    denom = max(S - 1, 1)
    mean = (sum_x / S).reshape(N, C)
    var = jnp.maximum((sumsq_x.reshape(N, C) - S * mean * mean) / denom, 0.0)
    mean_mix = mix @ mean
    var_mix = mix @ var
    scale = jnp.sqrt((var_mix + eps) / (var + eps))
    offset = mean_mix - mean * scale
    scale2 = scale.reshape(rows, 1).astype(jnp.float32)
    offset2 = offset.reshape(rows, 1).astype(jnp.float32)

    return pl.pallas_call(
        _apply_kernel,
        out_shape=jax.ShapeDtypeStruct((rows, S), x2.dtype),
        grid=grid,
        in_specs=[pl.BlockSpec((tm, S), lambda i: (i, 0)),
                  pl.BlockSpec((tm, 1), lambda i: (i, 0)),
                  pl.BlockSpec((tm, 1), lambda i: (i, 0))],
        out_specs=pl.BlockSpec((tm, S), lambda i: (i, 0)),
        compiler_params=cparams,
    )(x2, scale2, offset2)


# --------------------------------------------------------------------------
# Public wrapper
# --------------------------------------------------------------------------
def spa_spe_randomization(x, alpha, key, eps=EPS):
    """Training-mode forward. x: [N, C, L, H, W] -> (out same shape, idx: i32[N])."""
    # TODO(synk): eval-mode branch of the PyTorch module references an undefined
    # idx_swap (it would raise); only the training-mode path is implemented.
    # TODO(synk): forward-only; a custom_vjp would be needed for autodiff.
    N, C, L, H, W = x.shape
    S = L * H * W

    idx_swap = jax.random.permutation(key, N)
    a = jnp.float32(alpha)
    mix = (a * jnp.eye(N, dtype=jnp.float32)
           + (1.0 - a) * jax.nn.one_hot(idx_swap, N, dtype=jnp.float32))

    vmem_limit, target_bytes = _vmem_budget()
    itemsize = jnp.dtype(x.dtype).itemsize
    ct = _choose_ct(N, C, S, itemsize, target_bytes)

    if ct is not None:
        out3 = _fused_call(x.reshape(N, C, S), mix, ct, eps, vmem_limit)
        out = out3.reshape(N, C, L, H, W)
    else:
        out2 = _two_pass(x.reshape(N * C, S), mix, eps, vmem_limit, target_bytes)
        out = out2.reshape(N, C, L, H, W)
    return out, idx_swap.astype(jnp.int32)


# --------------------------------------------------------------------------
# Pure-JAX reference
# --------------------------------------------------------------------------
def _reference(x, alpha, idx_swap, eps=EPS):
    N, C, L, H, W = x.shape
    x3 = x.reshape(N, C, -1)
    mean = x3.mean(-1, keepdims=True)
    var = x3.var(-1, ddof=1, keepdims=True)
    xn = (x3 - mean) / jnp.sqrt(var + eps)
    mean_m = alpha * mean + (1 - alpha) * mean[idx_swap]
    var_m = alpha * var + (1 - alpha) * var[idx_swap]
    return (xn * jnp.sqrt(var_m + eps) + mean_m).reshape(N, C, L, H, W)


if __name__ == "__main__":
    key = jax.random.PRNGKey(0)
    kx, kp = jax.random.split(key)

    N, C, L, H, W = 2, 4, 4, 8, 8
    x = jax.random.normal(kx, (N, C, L, H, W), dtype=jnp.float32)
    alpha = 0.5  # nn.Parameter(torch.tensor(0.5)) — deterministic init

    out, idx_swap = spa_spe_randomization(x, alpha, kp)
    out = jax.block_until_ready(out)

    ref = _reference(x, alpha, idx_swap)
    assert jnp.allclose(out, ref, atol=1e-4, rtol=1e-4), "mismatch vs reference"

    print("KERNEL_OK")
</pallas_src>

<mosaic_0001>
module attributes {stable_mosaic.version = 11 : i64} {
  func.func @_fused_kernel(%arg0: i32, %arg1: memref<2x4x256xf32, #tpu.memory_space<vmem>>, %arg2: memref<2x2xf32, #tpu.memory_space<vmem>>, %arg3: memref<2x4x256xf32, #tpu.memory_space<vmem>>) attributes {dimension_semantics = [#tpu.dimension_semantics<parallel>], iteration_bounds = array<i64: 1>, scalar_prefetch = 0 : i64, scratch_operands = 0 : i64, tpu.core_type = #tpu.core_type<tc>, window_params = [{transform_indices = @transform_0, window_bounds = array<i64: 2, 4, 256>}, {pipeline_mode = #tpu.pipeline_mode<synchronous>, transform_indices = @transform_1, window_bounds = array<i64: 2, 2>}, {transform_indices = @transform_2, window_bounds = array<i64: 2, 4, 256>}]} {
    %c0 = arith.constant 0 : index
    %c0_0 = arith.constant 0 : index
    %c0_1 = arith.constant 0 : index
    %0 = vector.load %arg1[%c0, %c0_0, %c0_1] : memref<2x4x256xf32, #tpu.memory_space<vmem>>, vector<2x4x256xf32>
    %cst = arith.constant dense<0.000000e+00> : vector<2x4xf32>
    %1 = vector.multi_reduction <add>, %0, %cst [2] : vector<2x4x256xf32> to vector<2x4xf32>
    %2 = vector.shape_cast %1 : vector<2x4xf32> to vector<2x4x1xf32>
    %cst_2 = arith.constant 2.560000e+02 : f32
    %3 = vector.broadcast %cst_2 : f32 to vector<2x4x1xf32>
    %4 = arith.divf %2, %3 : vector<2x4x1xf32>
    %5 = vector.broadcast %4 : vector<2x4x1xf32> to vector<2x4x256xf32>
    %6 = arith.subf %0, %5 : vector<2x4x256xf32>
    %7 = arith.mulf %6, %6 : vector<2x4x256xf32>
    %cst_3 = arith.constant dense<0.000000e+00> : vector<2x4xf32>
    %8 = vector.multi_reduction <add>, %7, %cst_3 [2] : vector<2x4x256xf32> to vector<2x4xf32>
    %9 = vector.shape_cast %8 : vector<2x4xf32> to vector<2x4x1xf32>
    %cst_4 = arith.constant 0.00392156886 : f32
    %10 = vector.broadcast %cst_4 : f32 to vector<2x4x1xf32>
    %11 = arith.mulf %9, %10 : vector<2x4x1xf32>
    %c0_5 = arith.constant 0 : index
    %c0_6 = arith.constant 0 : index
    %12 = vector.load %arg2[%c0_5, %c0_6] : memref<2x2xf32, #tpu.memory_space<vmem>>, vector<2x2xf32>
    %cst_7 = arith.constant 0.000000e+00 : f32
    %13 = vector.broadcast %cst_7 : f32 to vector<2x4x1xf32>
    %cst_8 = arith.constant 0.000000e+00 : f32
    %14 = vector.broadcast %cst_8 : f32 to vector<2x4x1xf32>
    %15 = vector.extract_strided_slice %12 {offsets = [0, 0], sizes = [2, 1], strides = [1, 1]} : vector<2x2xf32> to vector<2x1xf32>
    %16 = vector.shape_cast %15 : vector<2x1xf32> to vector<2x1x1xf32>
    %17 = vector.extract_strided_slice %4 {offsets = [0, 0, 0], sizes = [1, 4, 1], strides = [1, 1, 1]} : vector<2x4x1xf32> to vector<1x4x1xf32>
    %18 = vector.broadcast %16 : vector<2x1x1xf32> to vector<2x4x1xf32>
    %19 = vector.broadcast %17 : vector<1x4x1xf32> to vector<2x4x1xf32>
    %20 = arith.mulf %18, %19 : vector<2x4x1xf32>
    %21 = arith.addf %13, %20 : vector<2x4x1xf32>
    %22 = vector.extract_strided_slice %11 {offsets = [0, 0, 0], sizes = [1, 4, 1], strides = [1, 1, 1]} : vector<2x4x1xf32> to vector<1x4x1xf32>
    %23 = vector.broadcast %16 : vector<2x1x1xf32> to vector<2x4x1xf32>
    %24 = vector.broadcast %22 : vector<1x4x1xf32> to vector<2x4x1xf32>
    %25 = arith.mulf %23, %24 : vector<2x4x1xf32>
    %26 = arith.addf %14, %25 : vector<2x4x1xf32>
    %27 = vector.extract_strided_slice %12 {offsets = [0, 1], sizes = [2, 1], strides = [1, 1]} : vector<2x2xf32> to vector<2x1xf32>
    %28 = vector.shape_cast %27 : vector<2x1xf32> to vector<2x1x1xf32>
    %29 = vector.extract_strided_slice %4 {offsets = [1, 0, 0], sizes = [1, 4, 1], strides = [1, 1, 1]} : vector<2x4x1xf32> to vector<1x4x1xf32>
    %30 = vector.broadcast %28 : vector<2x1x1xf32> to vector<2x4x1xf32>
    %31 = vector.broadcast %29 : vector<1x4x1xf32> to vector<2x4x1xf32>
    %32 = arith.mulf %30, %31 : vector<2x4x1xf32>
    %33 = arith.addf %21, %32 : vector<2x4x1xf32>
    %34 = vector.extract_strided_slice %11 {offsets = [1, 0, 0], sizes = [1, 4, 1], strides = [1, 1, 1]} : vector<2x4x1xf32> to vector<1x4x1xf32>
    %35 = vector.broadcast %28 : vector<2x1x1xf32> to vector<2x4x1xf32>
    %36 = vector.broadcast %34 : vector<1x4x1xf32> to vector<2x4x1xf32>
    %37 = arith.mulf %35, %36 : vector<2x4x1xf32>
    %38 = arith.addf %26, %37 : vector<2x4x1xf32>
    %cst_9 = arith.constant 9.99999974E-6 : f32
    %39 = vector.broadcast %cst_9 : f32 to vector<2x4x1xf32>
    %40 = arith.addf %38, %39 : vector<2x4x1xf32>
    %cst_10 = arith.constant 9.99999974E-6 : f32
    %41 = vector.broadcast %cst_10 : f32 to vector<2x4x1xf32>
    %42 = arith.addf %11, %41 : vector<2x4x1xf32>
    %43 = arith.divf %40, %42 : vector<2x4x1xf32>
    %44 = math.sqrt %43 : vector<2x4x1xf32>
    %45 = vector.broadcast %44 : vector<2x4x1xf32> to vector<2x4x256xf32>
    %46 = arith.mulf %6, %45 : vector<2x4x256xf32>
    %47 = vector.broadcast %33 : vector<2x4x1xf32> to vector<2x4x256xf32>
    %48 = arith.addf %46, %47 : vector<2x4x256xf32>
    %c0_11 = arith.constant 0 : index
    %c0_12 = arith.constant 0 : index
    %c0_13 = arith.constant 0 : index
    %49 = vector.load %arg3[%c0_11, %c0_12, %c0_13] : memref<2x4x256xf32, #tpu.memory_space<vmem>>, vector<2x4x256xf32>
    tpu.vector_store %arg3[%c0_11, %c0_12, %c0_13], %48 {strides = array<i32>} : memref<2x4x256xf32, #tpu.memory_space<vmem>>, vector<2x4x256xf32>,
    return
  }
  func.func @transform_0(%arg0: i32) -> (i32, i32, i32) {
    %c0_i32 = arith.constant 0 : i32
    %c0_i32_0 = arith.constant 0 : i32
    %c0_i32_1 = arith.constant 0 : i32
    return %c0_i32, %arg0, %c0_i32_0 : i32, i32, i32
  }
  func.func @transform_1(%arg0: i32) -> (i32, i32) {
    %c0_i32 = arith.constant 0 : i32
    %c0_i32_0 = arith.constant 0 : i32
    %c0_i32_1 = arith.constant 0 : i32
    return %c0_i32, %c0_i32_0 : i32, i32
  }
  func.func @transform_2(%arg0: i32) -> (i32, i32, i32) {
    %c0_i32 = arith.constant 0 : i32
    %c0_i32_0 = arith.constant 0 : i32
    %c0_i32_1 = arith.constant 0 : i32
    return %c0_i32, %arg0, %c0_i32_0 : i32, i32, i32
  }
}

</mosaic_0001>

<llo_original>
// kernel: tpu_custom_call.1
$region0: #{tpu_custom_call.1}
  #allocation0 [shape = 'u32[]', space=smem, size = 0x4, offset = 0x4, fixed_abs, tag = 'smem constant byte address 0x4 - core index']
  #allocation1 [shape = 'u32[144,128]{1,0:T(1,128)}', space=vmem, size = 0x12000, scoped, tag = 'internal scratch']
  %s0 = inlined_call_operand.hbm [shape: f32[2,4,256], index: 0, kind: input, shape index: {}]
  %s1 = inlined_call_operand.hbm [shape: f32[2,2], index: 1, kind: input, shape index: {}]
  %s2 = inlined_call_operand.hbm [shape: f32[2,4,256], index: 2, kind: output, shape index: {}]
  %s3 = sld [smem:[#allocation0]]
  $region26: #{tpu_custom_call.1} parent=0
    _
  %s5 = ssub.s32 1, %s3
  %s6 = scalar_select 0, %s5, %s3
  $region1: #{tpu_custom_call.1} parent=0
    #allocation2 [shape = 'u8[8192]{0}', space=vmem, size = 0x2000, scoped, tag = 'input window, operand 0, single buffered']
    #allocation3 [shape = 's32[1]{0}', space=sflag, size = 0x4, scoped, tag = 'scoped memory for tpu_custom_call.1']
    #allocation4 [shape = 's32[1]{0}', space=sflag, size = 0x4, scoped, tag = 'scoped memory for tpu_custom_call.1']
    #allocation5 [shape = 'u8[1024]{0}', space=vmem, size = 0x400, scoped, tag = 'input window, operand 1, single buffered']
    #allocation6 [shape = 's32[1]{0}', space=sflag, size = 0x4, scoped, tag = 'scoped memory for tpu_custom_call.1']
    #allocation7 [shape = 'u8[8192]{0}', space=vmem, size = 0x2000, scoped, tag = 'output window, operand 0, single buffered']
    %7 = vsyncpa [#allocation3], 0
    %8 = vsyncpa [#allocation6], 0
    %9 = vsyncpa [#allocation4], 0
    // Predicated region
    $region2: #{tpu_custom_call.1} parent=1 // pred_check
      _
    $region3: #{tpu_custom_call.1} parent=1 // pred_check_branch
      %11 = sbr.rel (0) target = $region5
    $region4: #{tpu_custom_call.1} parent=1 // pred_region
      %s13 = ssub.s32 256, 256
      %14 = vsyncadd [#allocation3], %s13
      %s15 = sshll.u32 [#allocation2], 4
      %s16 = int_to_ptr.vmem [resolvable:$true] %s15
      %21 = dma.hbm_to_vmem [thread:$0]  %s0, 256, %s16, [#allocation3], 128, 128, 8
    $region5: #{tpu_custom_call.1} parent=1 // pred_fallthru
      _
    // Predicated region
    $region6: #{tpu_custom_call.1} parent=1 // pred_check
      _
    $region7: #{tpu_custom_call.1} parent=1 // pred_check_branch
      %23 = sbr.rel (0) target = $region9
    $region8: #{tpu_custom_call.1} parent=1 // pred_region
      %s25 = ssub.s32 32, 32
      %26 = vsyncadd [#allocation6], %s25
      %s28 = sshll.u32 [#allocation5], 4
      %s29 = int_to_ptr.vmem [resolvable:$true] %s28
      %31 = dma.hbm_to_vmem [thread:$0]  %s1, 32, %s29, [#allocation6]
    $region9: #{tpu_custom_call.1} parent=1 // pred_fallthru
      _
    // Predicated region
    $region10: #{tpu_custom_call.1} parent=1 // pred_check
      _
    $region11: #{tpu_custom_call.1} parent=1 // pred_check_branch
      %33 = sbr.rel (0) target = $region13
    $region12: #{tpu_custom_call.1} parent=1 // pred_region
      %34 = dma.done [#allocation3], 256
    $region13: #{tpu_custom_call.1} parent=1 // pred_fallthru
      _
    // Predicated region
    $region14: #{tpu_custom_call.1} parent=1 // pred_check
      _
    $region15: #{tpu_custom_call.1} parent=1 // pred_check_branch
      %36 = sbr.rel (0) target = $region17
    $region16: #{tpu_custom_call.1} parent=1 // pred_region
      %37 = dma.done [#allocation6], 32
    $region17: #{tpu_custom_call.1} parent=1 // pred_fallthru
      _
    %v38 = vld [vmem:[#allocation2] sm:$0xff]
    %v39 = vld [vmem:[#allocation2 + $0x8] sm:$0xff]
    %v42 = vcombine.high %v38, %v38
    %v43 = vcombine.high %v39, %v39
    %vm46 = vcmask 1043456
    %v47 = vsel %vm46, %v38, 0.0
    %v48 = vsel %vm46, %v42, 0.0
    %v49 = vadd.f32 %v47, %v48
    %50 = vadd.xlane.f32.xlu0 %v49
    %v51 = vpop.xlane.xlu0 %50
    %v52 = vsel %vm46, %v39, 0.0
    %v53 = vsel %vm46, %v43, 0.0
    %v54 = vadd.f32 %v52, %v53
    %55 = vadd.xlane.f32.xlu0 %v54
    %v56 = vpop.xlane.xlu0 %55
    %v57 = vrcp.pop 256.0
    %v58 = vmul.f32 %v51, %v57
    %v59 = vmul.f32 %v56, %v57
    %v63 = vunpack.c.l.s4 839922192
    %v64 = vunpack.c.0.s8 %v63
    %v65 = vlaneseq
    %v66 = vshrl.u32 %v65, 7
    %v67 = vsub.s32 %v64, %v66
    %v68 = vrot.slane %v58, %v67
    %v70 = vunpack.c.l.s4 839922192
    %v71 = vunpack.c.0.s8 %v70
    %v72 = vlaneseq
    %v73 = vshrl.u32 %v72, 7
    %v74 = vsub.s32 %v71, %v73
    %v75 = vrot.slane %v59, %v74
    %v78 = vsub.f32 %v38, %v68
    %v79 = vsub.f32 %v39, %v75
    %v80 = vmul.f32 %v78, %v78
    %v81 = vmul.f32 %v79, %v79
    %v84 = vcombine.high %v80, %v80
    %v85 = vcombine.high %v81, %v81
    %v88 = vsel %vm46, %v80, 0.0
    %v89 = vsel %vm46, %v84, 0.0
    %v90 = vadd.f32 %v88, %v89
    %91 = vadd.xlane.f32.xlu0 %v90
    %v92 = vpop.xlane.xlu0 %91
    %v93 = vsel %vm46, %v81, 0.0
    %v94 = vsel %vm46, %v85, 0.0
    %v95 = vadd.f32 %v93, %v94
    %96 = vadd.xlane.f32.xlu0 %v95
    %v97 = vpop.xlane.xlu0 %96
    %v98 = vmul.f32 %v92, 0.003921569
    %v99 = vmul.f32 %v97, 0.003921569
    %v100 = vld [vmem:[#allocation5] sm:$0x3]
    %v103 = vunpack.c.l.s4 1966171168
    %v104 = vunpack.c.0.s8 %v103
    %v105 = vlaneseq
    %v106 = vshrl.u32 %v105, 7
    %v107 = vsub.s32 %v104, %v106
    %v108 = vrot.slane %v100, %v107
    %v109 = vcombine.high %v108, %v108
    %v111 = vunpack.c.l.s4 1966171168
    %v112 = vunpack.c.0.s8 %v111
    %v113 = vlaneseq
    %v114 = vshrl.u32 %v113, 7
    %v115 = vsub.s32 %v112, %v114
    %v116 = vrot.slane %v108, %v115
    %v118 = vunpack.c.l.s4 1966171168
    %v119 = vunpack.c.0.s8 %v118
    %v120 = vlaneseq
    %v121 = vshrl.u32 %v120, 7
    %v122 = vsub.s32 %v119, %v121
    %v123 = vrot.slane %v109, %v122
    %v124 = vlaneseq
    %v125 = vshrl.u32 %v124, 7
    %v126 = vsub.s32 0, %v125
    %v127 = vrot.slane %v116, %v126
    %v128 = vlaneseq
    %v129 = vshrl.u32 %v128, 7
    %v130 = vsub.s32 0, %v129
    %v131 = vrot.slane %v123, %v130
    %v134 = vmul.f32 %v127, %v58
    %v135 = vmul.f32 %v131, %v58
    %v136 = vadd.f32 %v134, 0.0
    %v137 = vadd.f32 %v135, 0.0
    %v138 = vmul.f32 %v127, %v98
    %v139 = vmul.f32 %v131, %v98
    %v140 = vadd.f32 %v138, 0.0
    %v141 = vadd.f32 %v139, 0.0
    %v142 = vmul.f32 %v127, %v59
    %v143 = vmul.f32 %v131, %v59
    %146 = vrot.lane.b32.xlu0 %v142, 127
    %v147 = vpop.permute.xlu0 %146
    %148 = vrot.lane.b32.xlu0 %v143, 127
    %v149 = vpop.permute.xlu0 %148
    %v152 = vadd.f32 %v136, %v147
    %v153 = vadd.f32 %v137, %v149
    %v154 = vmul.f32 %v127, %v99
    %v155 = vmul.f32 %v131, %v99
    %158 = vrot.lane.b32.xlu0 %v154, 127
    %v159 = vpop.permute.xlu0 %158
    %160 = vrot.lane.b32.xlu0 %v155, 127
    %v161 = vpop.permute.xlu0 %160
    %v164 = vadd.f32 %v140, %v159
    %v165 = vadd.f32 %v141, %v161
    %v166 = vadd.f32 %v164, 1e-05
    %v167 = vadd.f32 %v165, 1e-05
    %v168 = vadd.f32 %v98, 1e-05
    %v169 = vadd.f32 %v99, 1e-05
    %v170 = vrcp.pop %v168
    %v171 = vmul.f32 %v166, %v170
    %v172 = vrcp.pop %v169
    %v173 = vmul.f32 %v167, %v172
    %v174 = vrsqrt.pop %v171
    %v175 = vmul.f32 %v171, %v174
    %vm176 = vcmp.eq.f32.partialorder %v171, inf
    %v177 = vsel %vm176, %v171, %v175
    %vm178 = vcmp.eq.f32.partialorder %v171, 0.0
    %v179 = vand.u32 %v171, 2147483648
    %v180 = vsel %vm178, %v179, %v177
    %v181 = vrsqrt.pop %v173
    %v182 = vmul.f32 %v173, %v181
    %vm183 = vcmp.eq.f32.partialorder %v173, inf
    %v184 = vsel %vm183, %v173, %v182
    %vm185 = vcmp.eq.f32.partialorder %v173, 0.0
    %v186 = vand.u32 %v173, 2147483648
    %v187 = vsel %vm185, %v186, %v184
    %189 = vset.pattern.permute.xlu0 0
    %190 = vperm.xlu0 %189, %v180
    %v191 = vpop.permute.xlu0 %190
    %193 = vset.pattern.permute.xlu0 0
    %194 = vperm.xlu0 %193, %v187
    %v195 = vpop.permute.xlu0 %194
    %v197 = vunpack.c.l.s4 839922192
    %v198 = vunpack.c.0.s8 %v197
    %v199 = vlaneseq
    %v200 = vshrl.u32 %v199, 7
    %v201 = vsub.s32 %v198, %v200
    %v202 = vrot.slane %v191, %v201
    %v204 = vunpack.c.l.s4 839922192
    %v205 = vunpack.c.0.s8 %v204
    %v206 = vlaneseq
    %v207 = vshrl.u32 %v206, 7
    %v208 = vsub.s32 %v205, %v207
    %v209 = vrot.slane %v195, %v208
    %v212 = vmul.f32 %v78, %v202
    %v213 = vmul.f32 %v79, %v209
    %215 = vset.pattern.permute.xlu0 0
    %216 = vperm.xlu0 %215, %v152
    %v217 = vpop.permute.xlu0 %216
    %219 = vset.pattern.permute.xlu0 0
    %220 = vperm.xlu0 %219, %v153
    %v221 = vpop.permute.xlu0 %220
    %v223 = vunpack.c.l.s4 839922192
    %v224 = vunpack.c.0.s8 %v223
    %v225 = vlaneseq
    %v226 = vshrl.u32 %v225, 7
    %v227 = vsub.s32 %v224, %v226
    %v228 = vrot.slane %v217, %v227
    %v230 = vunpack.c.l.s4 839922192
    %v231 = vunpack.c.0.s8 %v230
    %v232 = vlaneseq
    %v233 = vshrl.u32 %v232, 7
    %v234 = vsub.s32 %v231, %v233
    %v235 = vrot.slane %v221, %v234
    %v238 = vadd.f32 %v212, %v228
    %v239 = vadd.f32 %v213, %v235
    %240 = vst [vmem:[#allocation7] sm:$0xff] %v238
    %241 = vst [vmem:[#allocation7 + $0x8] sm:$0xff] %v239
    // Predicated region
    $region18: #{tpu_custom_call.1} parent=1 // pred_check
      _
    $region19: #{tpu_custom_call.1} parent=1 // pred_check_branch
      %243 = sbr.rel (0) target = $region21
    $region20: #{tpu_custom_call.1} parent=1 // pred_region
      %s245 = ssub.s32 256, 256
      %246 = vsyncadd [#allocation4], %s245
      %s247 = sshll.u32 [#allocation7], 4
      %s248 = int_to_ptr.vmem [resolvable:$true] %s247
      %253 = dma.vmem_to_hbm [thread:$0]  %s248, 256, %s2, [#allocation4], 128, 128, 8
    $region21: #{tpu_custom_call.1} parent=1 // pred_fallthru
      _
    // Predicated region
    $region22: #{tpu_custom_call.1} parent=1 // pred_check
      _
    $region23: #{tpu_custom_call.1} parent=1 // pred_check_branch
      %255 = sbr.rel (0) target = $region25
    $region24: #{tpu_custom_call.1} parent=1 // pred_region
      %256 = dma.done [#allocation4], 256
    $region25: #{tpu_custom_call.1} parent=1 // pred_fallthru
      _
    %257 = vsyncpa [#allocation3], 1
    %258 = vsyncpa [#allocation6], 1
    %259 = vsyncpa [#allocation4], 1

</llo_original>
